<compile_context>
chip_gen: v7x
topology: tpu7x:2x2x1
jax: 0.10.0
libtpu: 0.0.40
codegen_flags: <defaults>
</compile_context>

<pallas_src>
import functools

import jax
import jax.numpy as jnp
from jax.experimental import pallas as pl
from jax.experimental.pallas import tpu as pltpu

_LANE = 128
_F32_TEMPS = 4        # ~number of (tile_n, tile_c) f32 temporaries live at once
_ROWVEC_BYTES = 512   # one lane-padded (tile_n, 1) f32/int32 row vector, per row
_ROWVEC_COUNT = 6     # labels double-buffer + per-row f32 temporaries (estimate)


# ----------------------------------------------------------------------------- #
# Kernels
# ----------------------------------------------------------------------------- #
def _ce_kernel_fullc(logits_ref, labels_ref, sum_ref, cnt_ref, acc_ref, vcnt_ref,
                     *, n_rows: int, n_classes: int):
    """Full-C row tile: loss_i = logsumexp(logits_i) - logits_i[label_i].

    Accumulates a per-core partial (sum, count) across the arbitrary row-tile axis
    and writes it out on the last step.  Rows past the end of the batch (tail
    padding / clamped overshoot blocks) and rows whose label is outside [0, C)
    (torch's ignore_index=-100) are dropped from both sum and count.  Garbage rows
    are never sanitized element-wise: every reduction is per-row, and the per-row
    jnp.where(valid, loss, 0) *select* keeps their NaN/Inf out of the sum.
    """
    tile_n, _ = logits_ref.shape
    c = pl.program_id(0)            # core split ("parallel", size 1 on v5e/v6e)
    i = pl.program_id(1)            # row-tile sweep ("arbitrary", carried accumulator)
    num_i = pl.num_programs(1)

    @pl.when(i == 0)
    def _():
        acc_ref[...] = jnp.zeros_like(acc_ref)
        vcnt_ref[...] = jnp.zeros_like(vcnt_ref)

    labels = labels_ref[...]                                         # (tile_n, 1) int32
    x = logits_ref[...].astype(jnp.float32)                          # (tile_n, C)

    # Numerically stable CE; the picked logit is taken from the shifted tensor so the
    # row max cancels: loss = (lse + m) - (picked_s + m) = lse - picked_s.
    m = jnp.max(x, axis=-1, keepdims=True)                           # (tile_n, 1)
    s = x - m
    lse = jnp.log(jnp.sum(jnp.exp(s), axis=-1, keepdims=True))       # (tile_n, 1)
    col = jax.lax.broadcasted_iota(jnp.int32, x.shape, 1)
    picked = jnp.sum(jnp.where(col == labels, s, 0.0), axis=-1, keepdims=True)
    loss = lse - picked                                              # (tile_n, 1)

    # Logical (unclamped) block id -> row validity for tail / overshoot rows.
    blk = c * num_i + i
    row = jax.lax.broadcasted_iota(jnp.int32, (tile_n, 1), 0)
    row_valid = (blk * tile_n + row) < n_rows
    label_valid = (labels >= 0) & (labels < n_classes)               # ignore_index=-100
    valid = row_valid & label_valid

    acc_ref[...] += jnp.sum(jnp.where(valid, loss, 0.0))
    vcnt_ref[...] += jnp.sum(valid.astype(jnp.float32))

    @pl.when(i == num_i - 1)
    def _():
        sum_ref[...] = acc_ref[...].reshape(1, 1, 1)
        cnt_ref[...] = vcnt_ref[...].reshape(1, 1, 1)


def _ce_kernel_ctiled(logits_ref, labels_ref, sum_ref, cnt_ref,
                      m_ref, l_ref, pk_ref, acc_ref, vcnt_ref,
                      *, n_rows: int, n_classes: int, c_padded: bool):
    """Class-tiled row tile with online logsumexp (running m, l) for vocab-scale C.

    Grid = (cores, row_tiles, c_tiles), innermost c-tile axis "arbitrary".  Per row
    tile the scratch carries running max m, running exp-sum l and the running picked
    (raw) logit; loss = (m + log l) - picked on the last c tile.
    """
    tile_n, tile_c = logits_ref.shape
    c = pl.program_id(0)
    i = pl.program_id(1)
    j = pl.program_id(2)
    num_i = pl.num_programs(1)
    num_j = pl.num_programs(2)

    @pl.when((i == 0) & (j == 0))
    def _():
        acc_ref[...] = jnp.zeros_like(acc_ref)
        vcnt_ref[...] = jnp.zeros_like(vcnt_ref)

    @pl.when(j == 0)
    def _():
        m_ref[...] = jnp.full(m_ref.shape, -jnp.inf, jnp.float32)
        l_ref[...] = jnp.zeros_like(l_ref)
        pk_ref[...] = jnp.zeros_like(pk_ref)

    labels = labels_ref[...]                                         # (tile_n, 1) int32
    x = logits_ref[...].astype(jnp.float32)                          # (tile_n, tile_c)
    col = jax.lax.broadcasted_iota(jnp.int32, x.shape, 1) + j * tile_c
    if c_padded:
        # Static branch: only emitted when C % tile_c != 0 (padded last class tile).
        x = jnp.where(col < n_classes, x, -jnp.inf)

    m_prev = m_ref[...]
    m_new = jnp.maximum(m_prev, jnp.max(x, axis=-1, keepdims=True))
    alpha = jnp.exp(m_prev - m_new)
    l_ref[...] = alpha * l_ref[...] + jnp.sum(jnp.exp(x - m_new), axis=-1, keepdims=True)
    m_ref[...] = m_new
    pk_ref[...] += jnp.sum(jnp.where(col == labels, x, 0.0), axis=-1, keepdims=True)

    @pl.when(j == num_j - 1)
    def _():
        blk = c * num_i + i
        row = jax.lax.broadcasted_iota(jnp.int32, (tile_n, 1), 0)
        row_valid = (blk * tile_n + row) < n_rows
        label_valid = (labels >= 0) & (labels < n_classes)
        valid = row_valid & label_valid
        loss = (m_ref[...] + jnp.log(l_ref[...])) - pk_ref[...]
        acc_ref[...] += jnp.sum(jnp.where(valid, loss, 0.0))
        vcnt_ref[...] += jnp.sum(valid.astype(jnp.float32))

    @pl.when((i == num_i - 1) & (j == num_j - 1))
    def _():
        sum_ref[...] = acc_ref[...].reshape(1, 1, 1)
        cnt_ref[...] = vcnt_ref[...].reshape(1, 1, 1)


# ----------------------------------------------------------------------------- #
# Tiling / generation heuristics
# ----------------------------------------------------------------------------- #
def _chip_defaults():
    """(live VMEM budget, vmem_limit cap, default num_cores) per TPU generation."""
    kind = ""
    try:
        kind = jax.devices()[0].device_kind.lower()
    except Exception:
        pass
    if "v7" in kind:                       # 64 MiB VMEM per TC, 2 TCs per chip
        return 22 << 20, 40 << 20, 2
    if "v5" in kind or "v6" in kind:       # 128 MiB VMEM, 1 TC per chip
        return 56 << 20, 96 << 20, 1
    return 18 << 20, 32 << 20, 1           # unknown chip: stay conservative


def _auto_config(C, itemsize, mult, live_budget):
    """Pick (tile_n, tile_c).  Full-C row tiles unless C forces tiny row tiles."""
    per_elem = 2 * itemsize + 4 * _F32_TEMPS        # double-buffered input + f32 temps
    per_row_fullc = C * per_elem + _ROWVEC_COUNT * _ROWVEC_BYTES
    tile_n = max(mult, (live_budget // per_row_fullc) // mult * mult)
    if tile_n >= 64:
        return tile_n, C                             # full-C path, large row tiles
    # Vocab-scale C: class-tile with a moderate row tile, online logsumexp in-kernel.
    tile_n = 256                                     # multiple of 8 and 16
    budget = live_budget - tile_n * (_ROWVEC_COUNT + 4) * _ROWVEC_BYTES
    tile_c = max(_LANE, (budget // (tile_n * per_elem)) // _LANE * _LANE)
    if tile_c >= C:
        return tile_n, C
    # Prefer a tile_c dividing C (skips the per-element column mask) when it is not
    # much smaller than the budget-sized tile.
    best_div = 0
    for k in range(tile_c // _LANE, 0, -1):
        if C % (k * _LANE) == 0:
            best_div = k * _LANE
            break
    if best_div >= tile_c // 2:
        return tile_n, best_div
    return tile_n, tile_c


# ----------------------------------------------------------------------------- #
# Wrapper
# ----------------------------------------------------------------------------- #
def cross_entropy_loss(logits: jax.Array, labels: jax.Array, *,
                       tile_n: int | None = None,
                       tile_c: int | None = None,
                       num_cores: int | None = None,
                       vmem_limit_bytes: int | None = None) -> jax.Array:
    """Mean softmax cross-entropy over rows of `logits` with integer `labels`.

    Matches torch.nn.CrossEntropyLoss() defaults (reduction='mean', ignore_index=-100,
    no class weights / label smoothing).  Accepts f32 or bf16 logits.
    If forcing `tile_c`, it must be a multiple of 128 (or >= C).
    """
    N, C = logits.shape
    itemsize = jnp.dtype(logits.dtype).itemsize
    # Row-tile multiple: 8 sublanes for 32-bit dtypes, 16 for bf16/fp16 packing.
    mult = 8 if itemsize >= 4 else 16

    live_budget, vmem_cap, default_cores = _chip_defaults()
    auto_n, auto_c = _auto_config(C, itemsize, mult, live_budget)
    if tile_n is None:
        tile_n = auto_n
    if tile_c is None:
        tile_c = auto_c
    tile_c = min(tile_c, C)
    class_tiled = tile_c < C
    c_padded = class_tiled and (C % tile_c != 0)

    if N <= mult:
        tile_n = N                              # single block equal to the full array dim
    else:
        tile_n = max(mult, min(tile_n, (N // mult) * mult))

    num_blocks = pl.cdiv(N, tile_n)
    if num_cores is None:
        num_cores = default_cores               # 2 only on v7x (2 TCs); 1 elsewhere
    num_cores = max(1, min(num_cores, num_blocks))
    num_i = pl.cdiv(num_blocks, num_cores)
    num_j = pl.cdiv(C, tile_c) if class_tiled else 1

    labels2 = labels.reshape(N, 1).astype(jnp.int32)

    if vmem_limit_bytes is None:
        live = (2 * tile_n * tile_c * itemsize            # double-buffered logits block
                + _F32_TEMPS * tile_n * tile_c * 4        # f32 elementwise temporaries
                + (_ROWVEC_COUNT + (4 if class_tiled else 0)) * tile_n * _ROWVEC_BYTES)
        vmem_limit_bytes = max(16 << 20, min(int(live * 1.25) + (2 << 20), vmem_cap))

    cost = pl.CostEstimate(
        flops=int(8 * N * C),
        transcendentals=int(N * C + 2 * N),
        bytes_accessed=int(N * C * itemsize + N * 4 + 8 * num_cores),
    )

    def _rowblk(c, i):
        # Clamp so the DMA always stays in bounds; overshoot blocks are masked in-kernel.
        return jnp.minimum(c * num_i + i, num_blocks - 1)

    if not class_tiled:
        grid = (num_cores, num_i)
        in_specs = [pl.BlockSpec((tile_n, C), lambda c, i: (_rowblk(c, i), 0)),
                    pl.BlockSpec((tile_n, 1), lambda c, i: (_rowblk(c, i), 0))]
        out_specs = (pl.BlockSpec((1, 1, 1), lambda c, i: (c, 0, 0)),
                     pl.BlockSpec((1, 1, 1), lambda c, i: (c, 0, 0)))
        scratch = [pltpu.VMEM((1, 1), jnp.float32),   # running loss sum (per core)
                   pltpu.VMEM((1, 1), jnp.float32)]   # running valid-row count
        kernel = functools.partial(_ce_kernel_fullc, n_rows=N, n_classes=C)
        semantics = ("parallel", "arbitrary")
    else:
        grid = (num_cores, num_i, num_j)
        in_specs = [pl.BlockSpec((tile_n, tile_c), lambda c, i, j: (_rowblk(c, i), j)),
                    pl.BlockSpec((tile_n, 1), lambda c, i, j: (_rowblk(c, i), 0))]
        out_specs = (pl.BlockSpec((1, 1, 1), lambda c, i, j: (c, 0, 0)),
                     pl.BlockSpec((1, 1, 1), lambda c, i, j: (c, 0, 0)))
        scratch = [pltpu.VMEM((tile_n, 1), jnp.float32),   # running max m
                   pltpu.VMEM((tile_n, 1), jnp.float32),   # running exp-sum l
                   pltpu.VMEM((tile_n, 1), jnp.float32),   # running picked logit
                   pltpu.VMEM((1, 1), jnp.float32),        # running loss sum
                   pltpu.VMEM((1, 1), jnp.float32)]        # running valid-row count
        kernel = functools.partial(_ce_kernel_ctiled, n_rows=N, n_classes=C,
                                   c_padded=c_padded)
        semantics = ("parallel", "arbitrary", "arbitrary")

    sums, cnts = pl.pallas_call(
        kernel,
        out_shape=(
            jax.ShapeDtypeStruct((num_cores, 1, 1), jnp.float32),
            jax.ShapeDtypeStruct((num_cores, 1, 1), jnp.float32),
        ),
        grid_spec=pltpu.PrefetchScalarGridSpec(
            num_scalar_prefetch=0,
            grid=grid,
            in_specs=in_specs,
            out_specs=out_specs,
            scratch_shapes=scratch,
        ),
        compiler_params=pltpu.CompilerParams(
            dimension_semantics=semantics,
            vmem_limit_bytes=vmem_limit_bytes,
        ),
        cost_estimate=cost,
    )(logits, labels2)

    total = jnp.sum(sums)
    count = jnp.sum(cnts)
    # reduction='mean': mean over non-ignored rows (NaN if all rows ignored — matches torch).
    return total / count


class CrossEntropyLoss:
    """Mirrors the PyTorch module: forward(inputs, outputs, ..., labels) -> ce(outputs, labels).
    `inputs`, `reduction` and `mask` are accepted for signature parity but unused, exactly
    as in the original module (self.ce is fixed to reduction='mean')."""

    def __call__(self, inputs=None, outputs=None, reduction: str = "mean",
                 mask=None, labels=None):
        return cross_entropy_loss(outputs, labels)


if __name__ == "__main__":
    key = jax.random.PRNGKey(0)
    k1, k2, k3, k4, k5, k6, k7, k8 = jax.random.split(key, 8)

    def ref_ce(lg, lb):
        valid = lb != -100
        lse = jax.nn.logsumexp(lg.astype(jnp.float32), axis=-1)
        picked = jnp.take_along_axis(
            lg.astype(jnp.float32),
            jnp.clip(lb, 0, lg.shape[1] - 1)[:, None], axis=-1)[:, 0]
        return jnp.sum(jnp.where(valid, lse - picked, 0.0)) / jnp.sum(valid)

    # 1) Small shapes consistent with the module's forward: logits (N, C), labels (N,)
    N, C = 8, 32
    logits = jax.random.normal(k1, (N, C), dtype=jnp.float32)
    labels = jax.random.randint(k2, (N,), 0, C, dtype=jnp.int32)
    loss = CrossEntropyLoss()(inputs=None, outputs=logits, labels=labels)
    jax.block_until_ready(loss)
    assert jnp.allclose(loss, ref_ce(logits, labels), rtol=1e-4, atol=1e-4), (
        loss, ref_ce(logits, labels))

    # 2) Ragged N (not a multiple of the row tile) + torch's ignore_index=-100.
    N2, C2 = 50, 40
    logits2 = jax.random.normal(k3, (N2, C2), dtype=jnp.float32)
    labels2 = jax.random.randint(k4, (N2,), 0, C2, dtype=jnp.int32).at[3].set(-100)
    loss2 = cross_entropy_loss(logits2, labels2)
    jax.block_until_ready(loss2)
    assert jnp.allclose(loss2, ref_ce(logits2, labels2), rtol=1e-4, atol=1e-4), (
        loss2, ref_ce(logits2, labels2))

    # 3) Forced class-tiled (online logsumexp) path: tile_c divides C.
    N3, C3 = 48, 512
    logits3 = jax.random.normal(k5, (N3, C3), dtype=jnp.float32)
    labels3 = jax.random.randint(k6, (N3,), 0, C3, dtype=jnp.int32).at[7].set(-100)
    loss3 = cross_entropy_loss(logits3, labels3, tile_n=16, tile_c=128)
    jax.block_until_ready(loss3)
    assert jnp.allclose(loss3, ref_ce(logits3, labels3), rtol=1e-4, atol=1e-4), (
        loss3, ref_ce(logits3, labels3))

    # 4) Forced class-tiled path with a padded last class tile (C % tile_c != 0).
    N4, C4 = 24, 320
    logits4 = jax.random.normal(k7, (N4, C4), dtype=jnp.float32)
    labels4 = jax.random.randint(k8, (N4,), 0, C4, dtype=jnp.int32).at[5].set(-100)
    loss4 = cross_entropy_loss(logits4, labels4, tile_n=8, tile_c=256)
    jax.block_until_ready(loss4)
    assert jnp.allclose(loss4, ref_ce(logits4, labels4), rtol=1e-4, atol=1e-4), (
        loss4, ref_ce(logits4, labels4))

    print("KERNEL_OK")
</pallas_src>

<mosaic_0001>
module attributes {stable_mosaic.version = 11 : i64} {
  func.func @_ce_kernel_fullc(%arg0: i32, %arg1: i32, %arg2: memref<8x32xf32, #tpu.memory_space<vmem>>, %arg3: memref<8x1xi32, #tpu.memory_space<vmem>>, %arg4: memref<1x1x1xf32, #tpu.memory_space<vmem>>, %arg5: memref<1x1x1xf32, #tpu.memory_space<vmem>>, %arg6: memref<1x1xf32, #tpu.memory_space<vmem>>, %arg7: memref<1x1xf32, #tpu.memory_space<vmem>>) attributes {dimension_semantics = [#tpu.dimension_semantics<parallel>, #tpu.dimension_semantics<arbitrary>], iteration_bounds = array<i64: 1, 1>, scalar_prefetch = 0 : i64, scratch_operands = 2 : i64, tpu.core_type = #tpu.core_type<tc>, window_params = [{transform_indices = @transform_0, window_bounds = array<i64: 8, 32>}, {transform_indices = @transform_1, window_bounds = array<i64: 8, 1>}, {transform_indices = @transform_2, window_bounds = array<i64: 1, 1, 1>}, {transform_indices = @transform_3, window_bounds = array<i64: 1, 1, 1>}]} {
    %c0_i32 = arith.constant 0 : i32
    %0 = arith.cmpi eq, %arg1, %c0_i32 : i32
    %1 = arith.extui %0 : i1 to i32
    %c0_i32_0 = arith.constant 0 : i32
    %2 = arith.cmpi ne, %1, %c0_i32_0 : i32
    scf.if %2 {
      %cst_22 = arith.constant 0.000000e+00 : f32
      %58 = vector.broadcast %cst_22 : f32 to vector<1x1xf32>
      %c0_23 = arith.constant 0 : index
      %c0_24 = arith.constant 0 : index
      %59 = vector.load %arg6[%c0_23, %c0_24] : memref<1x1xf32, #tpu.memory_space<vmem>>, vector<1x1xf32>
      tpu.vector_store %arg6[%c0_23, %c0_24], %58 {strides = array<i32>} : memref<1x1xf32, #tpu.memory_space<vmem>>, vector<1x1xf32>,
      %cst_25 = arith.constant 0.000000e+00 : f32
      %60 = vector.broadcast %cst_25 : f32 to vector<1x1xf32>
      %c0_26 = arith.constant 0 : index
      %c0_27 = arith.constant 0 : index
      %61 = vector.load %arg7[%c0_26, %c0_27] : memref<1x1xf32, #tpu.memory_space<vmem>>, vector<1x1xf32>
      tpu.vector_store %arg7[%c0_26, %c0_27], %60 {strides = array<i32>} : memref<1x1xf32, #tpu.memory_space<vmem>>, vector<1x1xf32>,
    } else {
    }
    %c0 = arith.constant 0 : index
    %c0_1 = arith.constant 0 : index
    %3 = vector.load %arg3[%c0, %c0_1] : memref<8x1xi32, #tpu.memory_space<vmem>>, vector<8x1xi32>
    %c0_2 = arith.constant 0 : index
    %c0_3 = arith.constant 0 : index
    %4 = vector.load %arg2[%c0_2, %c0_3] : memref<8x32xf32, #tpu.memory_space<vmem>>, vector<8x32xf32>
    %cst = arith.constant dense<0xFF800000> : vector<8xf32>
    %5 = vector.multi_reduction <maximumf>, %4, %cst [1] : vector<8x32xf32> to vector<8xf32>
    %6 = vector.shape_cast %5 : vector<8xf32> to vector<8x1xf32>
    %7 = vector.broadcast %6 : vector<8x1xf32> to vector<8x32xf32>
    %8 = arith.subf %4, %7 : vector<8x32xf32>
    %9 = math.exp %8 : vector<8x32xf32>
    %cst_4 = arith.constant dense<0.000000e+00> : vector<8xf32>
    %10 = vector.multi_reduction <add>, %9, %cst_4 [1] : vector<8x32xf32> to vector<8xf32>
    %11 = vector.shape_cast %10 : vector<8xf32> to vector<8x1xf32>
    %12 = math.log %11 : vector<8x1xf32>
    %13 = tpu.iota {dimensions = array<i32: 1>} : vector<8x32xi32>
    %14 = vector.broadcast %3 : vector<8x1xi32> to vector<8x32xi32>
    %15 = arith.cmpi eq, %13, %14 : vector<8x32xi32>
    %cst_5 = arith.constant 0.000000e+00 : f32
    %16 = vector.broadcast %cst_5 : f32 to vector<8x32xf32>
    %17 = arith.select %15, %8, %16 : vector<8x32xi1>, vector<8x32xf32>
    %cst_6 = arith.constant dense<0.000000e+00> : vector<8xf32>
    %18 = vector.multi_reduction <add>, %17, %cst_6 [1] : vector<8x32xf32> to vector<8xf32>
    %19 = vector.shape_cast %18 : vector<8xf32> to vector<8x1xf32>
    %20 = arith.subf %12, %19 : vector<8x1xf32>
    %c1_i32 = arith.constant 1 : i32
    %21 = arith.muli %arg0, %c1_i32 : i32
    %22 = arith.addi %21, %arg1 : i32
    %23 = tpu.iota {dimensions = array<i32: 0>} : vector<8x1xi32>
    %c8_i32 = arith.constant 8 : i32
    %24 = arith.muli %22, %c8_i32 : i32
    %25 = vector.broadcast %24 : i32 to vector<8x1xi32>
    %26 = arith.addi %25, %23 : vector<8x1xi32>
    %c8_i32_7 = arith.constant 8 : i32
    %27 = vector.broadcast %c8_i32_7 : i32 to vector<8x1xi32>
    %28 = arith.cmpi slt, %26, %27 : vector<8x1xi32>
    %c0_i32_8 = arith.constant 0 : i32
    %29 = vector.broadcast %c0_i32_8 : i32 to vector<8x1xi32>
    %30 = arith.cmpi sge, %3, %29 : vector<8x1xi32>
    %c32_i32 = arith.constant 32 : i32
    %31 = vector.broadcast %c32_i32 : i32 to vector<8x1xi32>
    %32 = arith.cmpi slt, %3, %31 : vector<8x1xi32>
    %33 = arith.andi %30, %32 : vector<8x1xi1>
    %34 = arith.andi %28, %33 : vector<8x1xi1>
    %c0_9 = arith.constant 0 : index
    %c0_10 = arith.constant 0 : index
    %35 = vector.load %arg6[%c0_9, %c0_10] : memref<1x1xf32, #tpu.memory_space<vmem>>, vector<1x1xf32>
    %cst_11 = arith.constant 0.000000e+00 : f32
    %36 = vector.broadcast %cst_11 : f32 to vector<8x1xf32>
    %37 = arith.select %34, %20, %36 : vector<8x1xi1>, vector<8x1xf32>
    %38 = vector.shape_cast %37 : vector<8x1xf32> to vector<1x8x1xf32>
    %cst_12 = arith.constant dense<0.000000e+00> : vector<1xf32>
    %39 = vector.multi_reduction <add>, %38, %cst_12 [1, 2] : vector<1x8x1xf32> to vector<1xf32>
    %40 = vector.shape_cast %39 : vector<1xf32> to vector<1x1x1xf32>
    %41 = vector.extract %40[0, 0, 0] : f32 from vector<1x1x1xf32>
    %42 = vector.broadcast %41 : f32 to vector<1x1xf32>
    %43 = arith.addf %35, %42 : vector<1x1xf32>
    %c0_13 = arith.constant 0 : index
    %c0_14 = arith.constant 0 : index
    %44 = vector.load %arg6[%c0_13, %c0_14] : memref<1x1xf32, #tpu.memory_space<vmem>>, vector<1x1xf32>
    tpu.vector_store %arg6[%c0_13, %c0_14], %43 {strides = array<i32>} : memref<1x1xf32, #tpu.memory_space<vmem>>, vector<1x1xf32>,
    %c0_15 = arith.constant 0 : index
    %c0_16 = arith.constant 0 : index
    %45 = vector.load %arg7[%c0_15, %c0_16] : memref<1x1xf32, #tpu.memory_space<vmem>>, vector<1x1xf32>
    %46 = arith.extui %34 : vector<8x1xi1> to vector<8x1xi32>
    %47 = arith.sitofp %46 : vector<8x1xi32> to vector<8x1xf32>
    %48 = vector.shape_cast %47 : vector<8x1xf32> to vector<1x8x1xf32>
    %cst_17 = arith.constant dense<0.000000e+00> : vector<1xf32>
    %49 = vector.multi_reduction <add>, %48, %cst_17 [1, 2] : vector<1x8x1xf32> to vector<1xf32>
    %50 = vector.shape_cast %49 : vector<1xf32> to vector<1x1x1xf32>
    %51 = vector.extract %50[0, 0, 0] : f32 from vector<1x1x1xf32>
    %52 = vector.broadcast %51 : f32 to vector<1x1xf32>
    %53 = arith.addf %45, %52 : vector<1x1xf32>
    %c0_18 = arith.constant 0 : index
    %c0_19 = arith.constant 0 : index
    %54 = vector.load %arg7[%c0_18, %c0_19] : memref<1x1xf32, #tpu.memory_space<vmem>>, vector<1x1xf32>
    tpu.vector_store %arg7[%c0_18, %c0_19], %53 {strides = array<i32>} : memref<1x1xf32, #tpu.memory_space<vmem>>, vector<1x1xf32>,
    %c0_i32_20 = arith.constant 0 : i32
    %55 = arith.cmpi eq, %arg1, %c0_i32_20 : i32
    %56 = arith.extui %55 : i1 to i32
    %c0_i32_21 = arith.constant 0 : i32
    %57 = arith.cmpi ne, %56, %c0_i32_21 : i32
    scf.if %57 {
      %c0_22 = arith.constant 0 : index
      %c0_23 = arith.constant 0 : index
      %58 = vector.load %arg6[%c0_22, %c0_23] : memref<1x1xf32, #tpu.memory_space<vmem>>, vector<1x1xf32>
      %59 = vector.shape_cast %58 : vector<1x1xf32> to vector<1x1x1xf32>
      %c0_24 = arith.constant 0 : index
      %c0_25 = arith.constant 0 : index
      %c0_26 = arith.constant 0 : index
      %60 = vector.load %arg4[%c0_24, %c0_25, %c0_26] : memref<1x1x1xf32, #tpu.memory_space<vmem>>, vector<1x1x1xf32>
      tpu.vector_store %arg4[%c0_24, %c0_25, %c0_26], %59 {strides = array<i32>} : memref<1x1x1xf32, #tpu.memory_space<vmem>>, vector<1x1x1xf32>,
      %c0_27 = arith.constant 0 : index
      %c0_28 = arith.constant 0 : index
      %61 = vector.load %arg7[%c0_27, %c0_28] : memref<1x1xf32, #tpu.memory_space<vmem>>, vector<1x1xf32>
      %62 = vector.shape_cast %61 : vector<1x1xf32> to vector<1x1x1xf32>
      %c0_29 = arith.constant 0 : index
      %c0_30 = arith.constant 0 : index
      %c0_31 = arith.constant 0 : index
      %63 = vector.load %arg5[%c0_29, %c0_30, %c0_31] : memref<1x1x1xf32, #tpu.memory_space<vmem>>, vector<1x1x1xf32>
      tpu.vector_store %arg5[%c0_29, %c0_30, %c0_31], %62 {strides = array<i32>} : memref<1x1x1xf32, #tpu.memory_space<vmem>>, vector<1x1x1xf32>,
    } else {
    }
    return
  }
  func.func @transform_0(%arg0: i32, %arg1: i32) -> (i32, i32) {
    %c1_i32 = arith.constant 1 : i32
    %0 = arith.muli %arg0, %c1_i32 : i32
    %1 = arith.addi %0, %arg1 : i32
    %c0_i32 = arith.constant 0 : i32
    %2 = arith.minsi %1, %c0_i32 : i32
    %c0_i32_0 = arith.constant 0 : i32
    %c0_i32_1 = arith.constant 0 : i32
    return %2, %c0_i32_0 : i32, i32
  }
  func.func @transform_1(%arg0: i32, %arg1: i32) -> (i32, i32) {
    %c1_i32 = arith.constant 1 : i32
    %0 = arith.muli %arg0, %c1_i32 : i32
    %1 = arith.addi %0, %arg1 : i32
    %c0_i32 = arith.constant 0 : i32
    %2 = arith.minsi %1, %c0_i32 : i32
    %c0_i32_0 = arith.constant 0 : i32
    %c0_i32_1 = arith.constant 0 : i32
    return %2, %c0_i32_0 : i32, i32
  }
  func.func @transform_2(%arg0: i32, %arg1: i32) -> (i32, i32, i32) {
    %c0_i32 = arith.constant 0 : i32
    %c0_i32_0 = arith.constant 0 : i32
    %c0_i32_1 = arith.constant 0 : i32
    return %arg0, %c0_i32, %c0_i32_0 : i32, i32, i32
  }
  func.func @transform_3(%arg0: i32, %arg1: i32) -> (i32, i32, i32) {
    %c0_i32 = arith.constant 0 : i32
    %c0_i32_0 = arith.constant 0 : i32
    %c0_i32_1 = arith.constant 0 : i32
    return %arg0, %c0_i32, %c0_i32_0 : i32, i32, i32
  }
}

</mosaic_0001>

<llo_original>
// kernel: tpu_custom_call.1
$region0: #{tpu_custom_call.1}
  #allocation0 [shape = 'u32[]', space=smem, size = 0x4, offset = 0x4, fixed_abs, tag = 'smem constant byte address 0x4 - core index']
  #allocation1 [shape = 'u32[144,128]{1,0:T(1,128)}', space=vmem, size = 0x12000, scoped, tag = 'internal scratch']
  #allocation2 [shape = 'f32[1,1]{1,0:T(1,128)}', space=vmem, size = 0x200, scoped, tag = 'scratch operand']
  #allocation3 [shape = 'f32[1,1]{1,0:T(1,128)}', space=vmem, size = 0x200, scoped, tag = 'scratch operand']
  %s0 = inlined_call_operand.vmem [shape: f32[8,32], index: 0, kind: input, shape index: {}]
  %s1 = inlined_call_operand.vmem [shape: s32[8,1], index: 1, kind: input, shape index: {}]
  %s2 = inlined_call_operand.hbm [shape: f32[1,1,1], index: 2, kind: output, shape index: {0}]
  %s3 = inlined_call_operand.hbm [shape: f32[1,1,1], index: 3, kind: output, shape index: {1}]
  %4 = xla_tuple %s2, %s3
  %s5 = sld [smem:[#allocation0]]
  $region34: #{tpu_custom_call.1} parent=0
    _
  %s7 = ssub.s32 1, %s5
  %s8 = scalar_select 0, %s7, %s5
  $region1: #{tpu_custom_call.1} parent=0
    #allocation4 [shape = 'u8[512]{0}', space=vmem, size = 0x400, scoped, tag = 'output window, operand 0, single buffered']
    #allocation5 [shape = 's32[1]{0}', space=sflag, size = 0x4, scoped, tag = 'scoped memory for tpu_custom_call.1']
    #allocation6 [shape = 'u8[512]{0}', space=vmem, size = 0x400, scoped, tag = 'output window, operand 1, single buffered']
    #allocation7 [shape = 's32[1]{0}', space=sflag, size = 0x4, scoped, tag = 'scoped memory for tpu_custom_call.1']
    %9 = vsyncpa [#allocation5], 0
    %10 = vsyncpa [#allocation7], 0
    // Predicated region
    $region2: #{tpu_custom_call.1} parent=1 // pred_check
      _
    $region3: #{tpu_custom_call.1} parent=1 // pred_check_branch
      %12 = sbr.rel (0) target = $region5
    $region4: #{tpu_custom_call.1} parent=1 // pred_region
      %s13 = sadd.s32 0, 0
      %p14 = scmp.lt.s32.totalorder %s13, 0
      %s15 = scalar_select %p14, %s13, 0
      %p16 = scmp.lt.s32.totalorder %s15, 0
      %s17 = scalar_select %p16, %s15, 0
      %s18 = smul.addr %s17, 8
      %s19 = scalar_lea.vmem %s0, %s18
      %s20 = sadd.s32 0, 0
      %p21 = scmp.lt.s32.totalorder %s20, 0
      %s22 = scalar_select %p21, %s20, 0
    $region5: #{tpu_custom_call.1} parent=1 // pred_fallthru
      _
    // Predicated region
    $region6: #{tpu_custom_call.1} parent=1 // pred_check
      _
    $region7: #{tpu_custom_call.1} parent=1 // pred_check_branch
      %24 = sbr.rel (0) target = $region9
    $region8: #{tpu_custom_call.1} parent=1 // pred_region
      %s25 = sadd.s32 0, 0
      %p26 = scmp.lt.s32.totalorder %s25, 0
      %s27 = scalar_select %p26, %s25, 0
      %p28 = scmp.lt.s32.totalorder %s27, 0
      %s29 = scalar_select %p28, %s27, 0
      %s30 = smul.addr %s29, 8
      %s31 = scalar_lea.vmem %s1, %s30
      %s32 = sadd.s32 0, 0
      %p33 = scmp.lt.s32.totalorder %s32, 0
      %s34 = scalar_select %p33, %s32, 0
    $region9: #{tpu_custom_call.1} parent=1 // pred_fallthru
      _
    %s35 = sadd.s32 0, 0
    %p36 = scmp.lt.s32.totalorder %s35, 0
    %s37 = scalar_select %p36, %s35, 0
    %p38 = scmp.lt.s32.totalorder %s37, 0
    %s39 = scalar_select %p38, %s37, 0
    %s40 = smul.addr %s39, 8
    %s41 = scalar_lea.vmem %s0, %s40
    %s42 = sadd.s32 0, 0
    %p43 = scmp.lt.s32.totalorder %s42, 0
    %s44 = scalar_select %p43, %s42, 0
    %p45 = scmp.lt.s32.totalorder %s44, 0
    %s46 = scalar_select %p45, %s44, 0
    %s47 = smul.addr %s46, 8
    %s48 = scalar_lea.vmem %s1, %s47
    %s49 = sadd.s32 0, 0
    %p50 = scmp.lt.s32.totalorder %s49, 0
    %s51 = scalar_select %p50, %s49, 0
    %p52 = scmp.lt.s32.totalorder %s51, 0
    %s53 = scalar_select %p52, %s51, 0
    %s54 = smul.addr %s53, 8
    %s55 = scalar_lea.vmem %s0, %s54
    %s56 = sadd.s32 0, 0
    %p57 = scmp.lt.s32.totalorder %s56, 0
    %s58 = scalar_select %p57, %s56, 0
    %s59 = sadd.s32 0, 0
    %p60 = scmp.lt.s32.totalorder %s59, 0
    %s61 = scalar_select %p60, %s59, 0
    %p62 = scmp.lt.s32.totalorder %s61, 0
    %s63 = scalar_select %p62, %s61, 0
    %s64 = smul.addr %s63, 8
    %s65 = scalar_lea.vmem %s1, %s64
    %s66 = sadd.s32 0, 0
    %p67 = scmp.lt.s32.totalorder %s66, 0
    %s68 = scalar_select %p67, %s66, 0
    %p69 = scmp.eq.s32.totalorder 0, 0
    // Predicated region
    $region10: #{tpu_custom_call.1} parent=1 // pred_check
      %p70 = pneg %p69
    $region11: #{tpu_custom_call.1} parent=1 // pred_check_branch
      %72 = sbr.rel (%p70) target = $region13
    $region12: #{tpu_custom_call.1} parent=1 // pred_region
      %vm73 = vcmask 0
      %74 = vst.msk [vmem:[#allocation2] sm:$0x1] %vm73, 0.0
      %75 = vst.msk [vmem:[#allocation3] sm:$0x1] %vm73, 0.0
    $region13: #{tpu_custom_call.1} parent=1 // pred_fallthru
      _
    %v76 = vld [vmem:[%s65] sm:$0xff]
    %v77 = vld [vmem:[%s55] sm:$0xff]
    %vm78 = vcmask 261120
    %v79 = vsel %vm78, %v77, -inf
    %80 = vmax.xlane.f32.xlu0 %v79
    %v81 = vpop.xlane.xlu0 %80
    %v82 = vsub.f32 %v77, %v81
    %v83 = vmul.f32 %v82, 1.442695
    %v84 = vpow.pop %v83
    %v85 = vsel %vm78, %v84, 0.0
    %86 = vadd.xlane.f32.xlu0 %v85
    %v87 = vpop.xlane.xlu0 %86
    %v88 = vlog2.pop %v87
    %v89 = vmul.f32 %v88, 0.6931472
    %v90 = vlaneseq
    %v91 = vand.u32 %v90, 127
    %92 = vset.pattern.permute.xlu0 0
    %93 = vperm.xlu0 %92, %v76
    %v94 = vpop.permute.xlu0 %93
    %vm95 = vcmp.eq.s32.totalorder %v91, %v94
    %v96 = vsel %vm95, %v82, 0.0
    %v97 = vsel %vm78, %v96, 0.0
    %98 = vadd.xlane.f32.xlu0 %v97
    %v99 = vpop.xlane.xlu0 %98
    %v100 = vsub.f32 %v89, %v99
    %s101 = sadd.s32 0, 0
    %v102 = vlaneseq
    %v103 = vshrl.u32 %v102, 7
    %s104 = smul.u32 %s101, 8
    %v105 = vstv %s104
    %v106 = vadd.s32 %v105, %v103
    %vm107 = vcmp.lt.s32.totalorder %v106, 8
    %vm108 = vcmp.ge.s32.totalorder %v76, 0
    %vm109 = vcmp.lt.s32.totalorder %v76, 32
    %vm110 = vmand %vm108, %vm109
    %vm111 = vmand %vm107, %vm110
    %v112 = vld [vmem:[#allocation2] sm:$0x1]
    %v113 = vsel %vm111, %v100, 0.0
    %vm114 = vcmask 7168
    %v115 = vsel %vm114, %v113, 0.0
    %116 = vadd.xlane.f32.xlu0 %v115
    %v117 = vpop.xlane.xlu0 %116
    %v118 = vrot.slane %v117, 4
    %v119 = vadd.f32 %v117, %v118
    %v120 = vrot.slane %v119, 2
    %v121 = vadd.f32 %v119, %v120
    %v122 = vrot.slane %v121, 1
    %v123 = vadd.f32 %v121, %v122
    %s124 = vtos %v123
    %v125 = vstv %s124
    %v126 = vadd.f32 %v112, %v125
    %vm127 = vcmask 0
    %128 = vst.msk [vmem:[#allocation2] sm:$0x1] %vm127, %v126
    %v129 = vld [vmem:[#allocation3] sm:$0x1]
    %v130 = vsel %vm111, 1, 0
    %v131 = vcvt.s32.f32 %v130
    %v132 = vsel %vm114, %v131, 0.0
    %133 = vadd.xlane.f32.xlu0 %v132
    %v134 = vpop.xlane.xlu0 %133
    %v135 = vrot.slane %v134, 4
    %v136 = vadd.f32 %v134, %v135
    %v137 = vrot.slane %v136, 2
    %v138 = vadd.f32 %v136, %v137
    %v139 = vrot.slane %v138, 1
    %v140 = vadd.f32 %v138, %v139
    %s141 = vtos %v140
    %v142 = vstv %s141
    %v143 = vadd.f32 %v129, %v142
    %144 = vst.msk [vmem:[#allocation3] sm:$0x1] %vm127, %v143
    // Predicated region
    $region14: #{tpu_custom_call.1} parent=1 // pred_check
      %p145 = pneg %p69
    $region15: #{tpu_custom_call.1} parent=1 // pred_check_branch
      %147 = sbr.rel (%p145) target = $region17
    $region16: #{tpu_custom_call.1} parent=1 // pred_region
      %v148 = vld [vmem:[#allocation2] sm:$0x1]
      %149 = vst.msk [vmem:[#allocation4] sm:$0x1] %vm127, %v148
      %v150 = vld [vmem:[#allocation3] sm:$0x1]
      %151 = vst.msk [vmem:[#allocation6] sm:$0x1] %vm127, %v150
    $region17: #{tpu_custom_call.1} parent=1 // pred_fallthru
      _
    // Predicated region
    $region18: #{tpu_custom_call.1} parent=1 // pred_check
      _
    $region19: #{tpu_custom_call.1} parent=1 // pred_check_branch
      %153 = sbr.rel (0) target = $region21
    $region20: #{tpu_custom_call.1} parent=1 // pred_region
      %s155 = ssub.s32 16, 16
      %156 = vsyncadd [#allocation5], %s155
      %s158 = sshll.u32 [#allocation4], 4
      %s159 = int_to_ptr.vmem [resolvable:$true] %s158
      %161 = dma.vmem_to_hbm [thread:$0]  %s159, 16, %s2, [#allocation5]
    $region21: #{tpu_custom_call.1} parent=1 // pred_fallthru
      _
    // Predicated region
    $region22: #{tpu_custom_call.1} parent=1 // pred_check
      _
    $region23: #{tpu_custom_call.1} parent=1 // pred_check_branch
      %163 = sbr.rel (0) target = $region25
    $region24: #{tpu_custom_call.1} parent=1 // pred_region
      %s165 = ssub.s32 16, 16
      %166 = vsyncadd [#allocation7], %s165
      %s168 = sshll.u32 [#allocation6], 4
      %s169 = int_to_ptr.vmem [resolvable:$true] %s168
      %171 = dma.vmem_to_hbm [thread:$0]  %s169, 16, %s3, [#allocation7]
    $region25: #{tpu_custom_call.1} parent=1 // pred_fallthru
      _
    // Predicated region
    $region26: #{tpu_custom_call.1} parent=1 // pred_check
      _
    $region27: #{tpu_custom_call.1} parent=1 // pred_check_branch
      %173 = sbr.rel (0) target = $region29
    $region28: #{tpu_custom_call.1} parent=1 // pred_region
      %174 = dma.done [#allocation5], 16
    $region29: #{tpu_custom_call.1} parent=1 // pred_fallthru
      _
    // Predicated region
    $region30: #{tpu_custom_call.1} parent=1 // pred_check
      _
    $region31: #{tpu_custom_call.1} parent=1 // pred_check_branch
      %176 = sbr.rel (0) target = $region33
    $region32: #{tpu_custom_call.1} parent=1 // pred_region
      %177 = dma.done [#allocation7], 16
    $region33: #{tpu_custom_call.1} parent=1 // pred_fallthru
      _
    %178 = vsyncpa [#allocation5], 1
    %179 = vsyncpa [#allocation7], 1

</llo_original>
